<compile_context>
chip_gen: v7x
topology: tpu7x:2x2x1
jax: 0.10.0
libtpu: 0.0.40
codegen_flags: <defaults>
</compile_context>

<pallas_src>
import math
import functools

import jax
import jax.numpy as jnp
import numpy as np
from jax.experimental import pallas as pl
from jax.experimental.pallas import tpu as pltpu

_TARGET_BLOCK_BYTES = 2 * 1024 * 1024   # ~2 MiB x-block per grid step (85%+ of HBM roofline)
_VMEM_LIMIT_BYTES = 24 * 1024 * 1024    # explicit: above v5e's 16 MiB scoped default,
                                        # below v7x's 32 MiB scoped / 64 MiB physical per TC


# ---------------------------------------------------------------------------
# Parameter ("buffer") construction -- mirrors PositionalEncoding.__init__
# ---------------------------------------------------------------------------
def make_positional_encoding(d_model: int, max_len: int) -> jnp.ndarray:
    """Returns pe of shape (max_len, d_model), float32.  (The singleton batch
    axis of the torch buffer is re-inserted by in-kernel broadcasting.)"""
    position = np.arange(0, max_len, dtype=np.float32)[:, None]              # (L, 1)
    div_term = np.exp(np.arange(0, d_model, 2, dtype=np.float32)
                      * (-math.log(10000.0) / d_model))                      # (D/2,)
    pe = np.zeros((max_len, d_model), dtype=np.float32)
    pe[:, 0::2] = np.sin(position * div_term)
    pe[:, 1::2] = np.cos(position * div_term)
    return jnp.asarray(pe)


# ---------------------------------------------------------------------------
# Kernels -- operate on (tile_S, B*D) x/out blocks and a compact (tile_S, D)
# pe block; pe is broadcast across batch in-VMEM (lane concat, free filler).
# ---------------------------------------------------------------------------
def _bcast_cols(pe_tile, batch: int):
    if batch == 1:
        return pe_tile
    return jnp.concatenate([pe_tile] * batch, axis=-1)   # (tile_S, D) -> (tile_S, B*D)


def pe_add_kernel(x_ref, pe_ref, o_ref, *, batch: int):
    o_ref[...] = (x_ref[...] + _bcast_cols(pe_ref[...], batch)).astype(o_ref.dtype)


def pe_add_dropout_hw_kernel(seed_ref, x_ref, pe_ref, o_ref, *,
                             batch: int, threshold: int, scale: float):
    """Training-mode inverted dropout via the TPU hardware PRNG.
    Seed is collision-free across (seed, tile): consecutive step seeds can
    never alias another step's tile stream (tile < num_programs)."""
    pltpu.prng_seed(seed_ref[0] * pl.num_programs(0) + pl.program_id(0))
    y = x_ref[...] + _bcast_cols(pe_ref[...], batch)
    bits = pltpu.bitcast(pltpu.prng_random_bits(y.shape), jnp.uint32)
    keep = bits >= jnp.uint32(threshold)                   # P(keep) = 1 - p
    o_ref[...] = jnp.where(keep, y * jnp.asarray(scale, y.dtype),
                           jnp.zeros_like(y)).astype(o_ref.dtype)


def pe_add_dropout_bits_kernel(x_ref, pe_ref, bits_ref, o_ref, *,
                               batch: int, threshold: int, scale: float):
    """Same dropout math with random bits supplied as an input array.
    Used on non-TPU / interpret backends where pltpu.prng_* has no lowering."""
    y = x_ref[...] + _bcast_cols(pe_ref[...], batch)
    keep = bits_ref[...] >= jnp.uint32(threshold)
    o_ref[...] = jnp.where(keep, y * jnp.asarray(scale, y.dtype),
                           jnp.zeros_like(y)).astype(o_ref.dtype)


# ---------------------------------------------------------------------------
# Wrapper
# ---------------------------------------------------------------------------
def _pick_tile_rows(S: int, row_bytes: int, itemsize: int) -> int:
    """Row tile: ~_TARGET_BLOCK_BYTES per x block, sublane-multiple scaled by
    dtype (8 for 4B, 16 for 2B, 32 for 1B), and >=2 grid steps when possible
    so v7x can shard the parallel axis across both TensorCores."""
    sub = max(8, 32 // itemsize)
    if S <= sub:
        return S                                   # single block; dims == full dims
    by_bytes = max(sub, (_TARGET_BLOCK_BYTES // max(row_bytes, 1)) // sub * sub)
    half = -(-S // 2)                              # ceil(S / 2)
    half = -(-half // sub) * sub                   # round up to sublane multiple
    return min(by_bytes, half)


def positional_encoding_forward(x, pe, *, p: float = 0.1,
                                training: bool = False, seed: int = 0):
    """x: (S, B, D), pe: (max_len, D).  Returns dropout(x + pe[:S]) with x's dtype.

    Note: when training=True, callers must vary `seed` per step, otherwise the
    same dropout mask is reused every call."""
    S, B, D = x.shape
    assert pe.shape[0] >= S and pe.shape[1] == D
    assert 0.0 <= p < 1.0, "dropout p must be in [0, 1)"

    dtype = x.dtype
    BD = B * D
    x2 = x.reshape(S, BD)                                   # free contiguous reshape
    pe_s = pe if (pe.shape[0] == S and pe.dtype == dtype) else pe[:S].astype(dtype)

    itemsize = jnp.dtype(dtype).itemsize
    tile_s = _pick_tile_rows(S, BD * itemsize, itemsize)
    grid = (pl.cdiv(S, tile_s),)                            # ragged tail is masked by Pallas
    # TODO(synk): for extreme B*D (>> 4 MiB per 8 rows) add a second grid axis
    # over column tiles (multiple of D) instead of growing the row block.

    x_spec = pl.BlockSpec((tile_s, BD), lambda i, *_: (i, 0))
    pe_spec = pl.BlockSpec((tile_s, D), lambda i, *_: (i, 0))
    out_shape = jax.ShapeDtypeStruct((S, BD), dtype)
    cparams = pltpu.CompilerParams(dimension_semantics=("parallel",),
                                   vmem_limit_bytes=_VMEM_LIMIT_BYTES)

    if not training or p == 0.0:
        out2 = pl.pallas_call(
            functools.partial(pe_add_kernel, batch=B),
            out_shape=out_shape,
            grid_spec=pltpu.PrefetchScalarGridSpec(
                num_scalar_prefetch=0, grid=grid,
                in_specs=[x_spec, pe_spec], out_specs=x_spec),
            compiler_params=cparams,
        )(x2, pe_s)
    else:
        threshold = min(int(round(p * 2.0 ** 32)), 2 ** 32 - 1)
        scale = 1.0 / (1.0 - p)
        if jax.default_backend() == "tpu":
            seed_arr = jnp.asarray([seed], dtype=jnp.int32)
            out2 = pl.pallas_call(
                functools.partial(pe_add_dropout_hw_kernel, batch=B,
                                  threshold=threshold, scale=scale),
                out_shape=out_shape,
                grid_spec=pltpu.PrefetchScalarGridSpec(
                    num_scalar_prefetch=1,            # seed lands in SMEM
                    grid=grid,
                    in_specs=[x_spec, pe_spec], out_specs=x_spec),
                compiler_params=cparams,
            )(seed_arr, x2, pe_s)
        else:
            bits = jax.random.bits(jax.random.PRNGKey(seed), (S, BD), dtype=jnp.uint32)
            out2 = pl.pallas_call(
                functools.partial(pe_add_dropout_bits_kernel, batch=B,
                                  threshold=threshold, scale=scale),
                out_shape=out_shape,
                grid_spec=pltpu.PrefetchScalarGridSpec(
                    num_scalar_prefetch=0, grid=grid,
                    in_specs=[x_spec, pe_spec, x_spec], out_specs=x_spec),
                compiler_params=cparams,
            )(x2, pe_s, bits)

    return out2.reshape(S, B, D)


# ---------------------------------------------------------------------------
# Demo / check
# ---------------------------------------------------------------------------
if __name__ == "__main__":
    d_model = 32
    max_len = 64
    seq_len = 8
    batch = 2
    p = 0.1

    pe = make_positional_encoding(d_model, max_len)
    key = jax.random.PRNGKey(0)
    x = jax.random.normal(key, (seq_len, batch, d_model), dtype=jnp.float32)
    ref = np.asarray(x) + np.asarray(pe)[:seq_len][:, None, :]

    # Eval-mode forward (dropout = identity) -> deterministic, exact vs ref.
    out = jax.block_until_ready(positional_encoding_forward(x, pe, p=p, training=False))
    np.testing.assert_allclose(np.asarray(out), ref, rtol=1e-6, atol=1e-6)

    # Multi-step grid + ragged tail path (S=20 -> tile 16, grid 2).
    x2 = jax.random.normal(jax.random.PRNGKey(1), (20, batch, d_model), dtype=jnp.float32)
    ref2 = np.asarray(x2) + np.asarray(pe)[:20][:, None, :]
    out2 = jax.block_until_ready(positional_encoding_forward(x2, pe, p=p, training=False))
    np.testing.assert_allclose(np.asarray(out2), ref2, rtol=1e-6, atol=1e-6)

    # Training-mode forward: each element is either exactly 0 (dropped) or
    # ref / (1 - p) (kept).  (Mask cannot be bitwise-identical to torch's RNG.)
    out_tr = jax.block_until_ready(
        positional_encoding_forward(x, pe, p=p, training=True, seed=42))
    out_tr = np.asarray(out_tr)
    ref_scaled = ref / (1.0 - p)
    ok = np.isclose(out_tr, ref_scaled, rtol=1e-5, atol=1e-6) | (out_tr == 0.0)
    assert ok.all(), "training output must be 0 (dropped) or ref/(1-p) (kept)"
    n_drop = int((out_tr == 0.0).sum())
    assert 0 < n_drop < out_tr.size  # with 512 elems and p=0.1, P(fail) ~ 1e-23

    print("KERNEL_OK")
</pallas_src>

<mosaic_0001>
module attributes {stable_mosaic.version = 11 : i64} {
  func.func @pe_add_kernel(%arg0: i32, %arg1: memref<8x64xf32, #tpu.memory_space<vmem>>, %arg2: memref<8x32xf32, #tpu.memory_space<vmem>>, %arg3: memref<8x64xf32, #tpu.memory_space<vmem>>) attributes {dimension_semantics = [#tpu.dimension_semantics<parallel>], iteration_bounds = array<i64: 1>, scalar_prefetch = 0 : i64, scratch_operands = 0 : i64, tpu.core_type = #tpu.core_type<tc>, window_params = [{transform_indices = @transform_0, window_bounds = array<i64: 8, 64>}, {transform_indices = @transform_1, window_bounds = array<i64: 8, 32>}, {transform_indices = @transform_2, window_bounds = array<i64: 8, 64>}]} {
    %c0 = arith.constant 0 : index
    %c0_0 = arith.constant 0 : index
    %0 = vector.load %arg1[%c0, %c0_0] : memref<8x64xf32, #tpu.memory_space<vmem>>, vector<8x64xf32>
    %c0_1 = arith.constant 0 : index
    %c0_2 = arith.constant 0 : index
    %1 = vector.load %arg2[%c0_1, %c0_2] : memref<8x32xf32, #tpu.memory_space<vmem>>, vector<8x32xf32>
    %2 = tpu.concatenate %1, %1 in 1 : vector<8x32xf32>, vector<8x32xf32> -> vector<8x64xf32>
    %3 = arith.addf %0, %2 : vector<8x64xf32>
    %c0_3 = arith.constant 0 : index
    %c0_4 = arith.constant 0 : index
    %4 = vector.load %arg3[%c0_3, %c0_4] : memref<8x64xf32, #tpu.memory_space<vmem>>, vector<8x64xf32>
    tpu.vector_store %arg3[%c0_3, %c0_4], %3 {strides = array<i32>} : memref<8x64xf32, #tpu.memory_space<vmem>>, vector<8x64xf32>,
    return
  }
  func.func @transform_0(%arg0: i32) -> (i32, i32) {
    %c0_i32 = arith.constant 0 : i32
    %c0_i32_0 = arith.constant 0 : i32
    return %arg0, %c0_i32 : i32, i32
  }
  func.func @transform_1(%arg0: i32) -> (i32, i32) {
    %c0_i32 = arith.constant 0 : i32
    %c0_i32_0 = arith.constant 0 : i32
    return %arg0, %c0_i32 : i32, i32
  }
  func.func @transform_2(%arg0: i32) -> (i32, i32) {
    %c0_i32 = arith.constant 0 : i32
    %c0_i32_0 = arith.constant 0 : i32
    return %arg0, %c0_i32 : i32, i32
  }
}

</mosaic_0001>

<llo_original>
// kernel: tpu_custom_call.1
$region0: #{tpu_custom_call.1}
  #allocation0 [shape = 'u32[]', space=smem, size = 0x4, offset = 0x4, fixed_abs, tag = 'smem constant byte address 0x4 - core index']
  #allocation1 [shape = 'u32[144,128]{1,0:T(1,128)}', space=vmem, size = 0x12000, scoped, tag = 'internal scratch']
  %s0 = inlined_call_operand.hbm [shape: f32[8,64], index: 0, kind: input, shape index: {}]
  %s1 = inlined_call_operand.hbm [shape: f32[8,32], index: 1, kind: input, shape index: {}]
  %s2 = inlined_call_operand.hbm [shape: f32[8,64], index: 2, kind: output, shape index: {}]
  %s3 = sld [smem:[#allocation0]]
  $region26: #{tpu_custom_call.1} parent=0
    _
  %s5 = ssub.s32 1, %s3
  %s6 = scalar_select 0, %s5, %s3
  $region1: #{tpu_custom_call.1} parent=0
    #allocation2 [shape = 'u8[4096]{0}', space=vmem, size = 0x1000, scoped, tag = 'input window, operand 0, single buffered']
    #allocation3 [shape = 's32[1]{0}', space=sflag, size = 0x4, scoped, tag = 'scoped memory for tpu_custom_call.1']
    #allocation4 [shape = 's32[1]{0}', space=sflag, size = 0x4, scoped, tag = 'scoped memory for tpu_custom_call.1']
    #allocation5 [shape = 'u8[4096]{0}', space=vmem, size = 0x1000, scoped, tag = 'input window, operand 1, single buffered']
    #allocation6 [shape = 's32[1]{0}', space=sflag, size = 0x4, scoped, tag = 'scoped memory for tpu_custom_call.1']
    #allocation7 [shape = 'u8[4096]{0}', space=vmem, size = 0x1000, scoped, tag = 'output window, operand 0, single buffered']
    %7 = vsyncpa [#allocation3], 0
    %8 = vsyncpa [#allocation6], 0
    %9 = vsyncpa [#allocation4], 0
    // Predicated region
    $region2: #{tpu_custom_call.1} parent=1 // pred_check
      _
    $region3: #{tpu_custom_call.1} parent=1 // pred_check_branch
      %11 = sbr.rel (0) target = $region5
    $region4: #{tpu_custom_call.1} parent=1 // pred_region
      %s13 = ssub.s32 128, 128
      %14 = vsyncadd [#allocation3], %s13
      %s16 = sshll.u32 [#allocation2], 4
      %s17 = int_to_ptr.vmem [resolvable:$true] %s16
      %19 = dma.hbm_to_vmem [thread:$0]  %s0, 128, %s17, [#allocation3]
    $region5: #{tpu_custom_call.1} parent=1 // pred_fallthru
      _
    // Predicated region
    $region6: #{tpu_custom_call.1} parent=1 // pred_check
      _
    $region7: #{tpu_custom_call.1} parent=1 // pred_check_branch
      %21 = sbr.rel (0) target = $region9
    $region8: #{tpu_custom_call.1} parent=1 // pred_region
      %s23 = ssub.s32 128, 128
      %24 = vsyncadd [#allocation6], %s23
      %s26 = sshll.u32 [#allocation5], 4
      %s27 = int_to_ptr.vmem [resolvable:$true] %s26
      %29 = dma.hbm_to_vmem [thread:$0]  %s1, 128, %s27, [#allocation6]
    $region9: #{tpu_custom_call.1} parent=1 // pred_fallthru
      _
    // Predicated region
    $region10: #{tpu_custom_call.1} parent=1 // pred_check
      _
    $region11: #{tpu_custom_call.1} parent=1 // pred_check_branch
      %31 = sbr.rel (0) target = $region13
    $region12: #{tpu_custom_call.1} parent=1 // pred_region
      %32 = dma.done [#allocation3], 128
    $region13: #{tpu_custom_call.1} parent=1 // pred_fallthru
      _
    // Predicated region
    $region14: #{tpu_custom_call.1} parent=1 // pred_check
      _
    $region15: #{tpu_custom_call.1} parent=1 // pred_check_branch
      %34 = sbr.rel (0) target = $region17
    $region16: #{tpu_custom_call.1} parent=1 // pred_region
      %35 = dma.done [#allocation6], 128
    $region17: #{tpu_custom_call.1} parent=1 // pred_fallthru
      _
    %v36 = vld [vmem:[#allocation2] sm:$0xff]
    %v37 = vld [vmem:[#allocation5] sm:$0xff]
    %39 = vrot.lane.b32.xlu0 %v37, 32
    %v40 = vpop.permute.xlu0 %39
    %vm42 = vcmask 261120
    %v43 = vsel %vm42, %v37, %v40
    %v44 = vadd.f32 %v36, %v43
    %vm45 = vcmask 523264
    %46 = vst.msk [vmem:[#allocation7] sm:$0xff] %vm45, %v44
    // Predicated region
    $region18: #{tpu_custom_call.1} parent=1 // pred_check
      _
    $region19: #{tpu_custom_call.1} parent=1 // pred_check_branch
      %48 = sbr.rel (0) target = $region21
    $region20: #{tpu_custom_call.1} parent=1 // pred_region
      %s50 = ssub.s32 128, 128
      %51 = vsyncadd [#allocation4], %s50
      %s53 = sshll.u32 [#allocation7], 4
      %s54 = int_to_ptr.vmem [resolvable:$true] %s53
      %56 = dma.vmem_to_hbm [thread:$0]  %s54, 128, %s2, [#allocation4]
    $region21: #{tpu_custom_call.1} parent=1 // pred_fallthru
      _
    // Predicated region
    $region22: #{tpu_custom_call.1} parent=1 // pred_check
      _
    $region23: #{tpu_custom_call.1} parent=1 // pred_check_branch
      %58 = sbr.rel (0) target = $region25
    $region24: #{tpu_custom_call.1} parent=1 // pred_region
      %59 = dma.done [#allocation4], 128
    $region25: #{tpu_custom_call.1} parent=1 // pred_fallthru
      _
    %60 = vsyncpa [#allocation3], 1
    %61 = vsyncpa [#allocation6], 1
    %62 = vsyncpa [#allocation4], 1

</llo_original>
